<compile_context>
chip_gen: v5e
topology: v5e:2x2
jax: 0.10.0
libtpu: 0.0.40
codegen_flags: <defaults>
</compile_context>

<pallas_src>
import math

import jax
import jax.numpy as jnp
from jax.experimental import pallas as pl
from jax.experimental.pallas import tpu as pltpu


def _round_up(v, m):
    return ((v + m - 1) // m) * m


def _vmem_capacity_bytes():
    try:
        return int(pltpu.get_tpu_info().vmem_capacity_bytes)
    except Exception:
        return 128 * 1024 * 1024


def _align_tb(tb, cout):
    # smallest tb' >= tb with (tb' * cout) % 16 == 0 (bf16 vreg tiles are (16,128))
    tb = max(1, int(tb))
    step = 16 // math.gcd(cout, 16)
    return _round_up(tb, step)


def _adj_conv_kernel(xw_ref, aT_ref, ae_ref, inv_ref, o_ref, acc_ref):
    # per grid step (s = segment, b = batch tile, j = step-3 contraction tile):
    #   xw  : (1, rows, 2*Lp)  [xw0 | xw1] channel-mixed rows, bf16 (j-invariant)
    #   aT  : (1, 2*Lp, TJ)    [ae.T ; ao.T], bf16 (exact 0/1)
    #   ae  : (1, TJ, Lp)      even adjacency rows, bf16 (exact 0/1)
    #   inv : (1, 1, Lp)       1 / clamp(col_sum, 0->1), f32
    #   out : (1, rows, Lp)    (x dtype)
    #   acc : (rows, Lp)       f32 scratch accumulator across the j axis
    j = pl.program_id(2)

    @pl.when(j == 0)
    def _():
        acc_ref[...] = jnp.zeros_like(acc_ref)

    # steps 1+2 fused into a single MXU drain: y2 = xw0 @ ae.T + xw1 @ ao.T
    y2 = jnp.dot(xw_ref[0], aT_ref[0], preferred_element_type=jnp.float32)
    # step 3 partial contraction over this J tile
    acc_ref[...] += jnp.dot(y2.astype(ae_ref.dtype), ae_ref[0],
                            preferred_element_type=jnp.float32)

    @pl.when(j == pl.num_programs(2) - 1)
    def _():
        # f32 VPU post-scale (rides in idle VALU slots under the MXU)
        o_ref[0] = (acc_ref[...] * inv_ref[0]).astype(o_ref.dtype)


def adjacency_conv(x, adjs, weight):
    """AdjacencyConv.forward.

    x: (N, Cin, L_total); adjs: list of dense (M_d, L_d) adjacency segments
    (M_d even); weight: (Cout, Cin, 2) Conv1d(k=2, s=2, bias=False) weight.
    """
    N, Cin, L_total = x.shape
    Cout, Cin_w, K = weight.shape
    assert Cin_w == Cin and K == 2
    out_dtype = x.dtype
    if not adjs:
        return jnp.zeros((N, Cout, 0), out_dtype)

    cdt = jnp.bfloat16  # MXU compute dtype (accumulation stays f32 in the kernel)
    vmem_cap = _vmem_capacity_bytes()
    big_vmem = vmem_cap > 96 * 1024 * 1024            # v5e/v6e: 128 MiB; v7x: 64 MiB
    rows_target = 512 if big_vmem else 256
    vmem_budget = (96 if big_vmem else 44) * 1024 * 1024
    J_TILE = 512                                      # max step-3 contraction tile

    # ---- grid-invariant Conv1d channel mix (weight shared by all segments),
    #      hoisted to XLA and staged in bf16 -------------------------------
    w0 = weight[:, :, 0]
    w1 = weight[:, :, 1]
    xw0 = jnp.einsum("oc,ncl->nol", w0, x).astype(cdt)   # (N, Cout, L_total)
    xw1 = jnp.einsum("oc,ncl->nol", w1, x).astype(cdt)

    # ---- bucket segments by padded (Lp, Jp) so heterogeneous segments are not
    #      all padded to the global maximum --------------------------------
    pieces = [None] * len(adjs)
    buckets = {}
    start = 0
    for d, adj in enumerate(adjs):
        M_d, L_d = int(adj.shape[0]), int(adj.shape[1])
        stop = start + L_d
        assert stop <= L_total
        if M_d == 0 or L_d == 0:
            # TODO(synk): PyTorch zeroes the Cin input channels in place for empty
            # adjacencies; emitting Cout zero channels only matches when Cin == Cout.
            pieces[d] = jnp.zeros((N, Cout, L_d), out_dtype)
            start = stop
            continue
        assert M_d % 2 == 0, "Conv1d(k=2,s=2) path needs an even number of adjacency rows"
        J_d = M_d // 2
        Lp = _round_up(L_d, 128)                       # lane-dense sequence tiles
        if J_d >= 64:
            Jp = _round_up(J_d, 128)                   # lane-full MXU output-N
        else:
            Jp = max(8, _round_up(J_d, 8))             # tiny J: avoid padded-FLOP blowup
        if Jp > J_TILE:
            Jp = _round_up(Jp, J_TILE)                 # J grid axis tiles evenly
        buckets.setdefault((Lp, Jp), []).append((d, start, L_d, J_d, adj))
        start = stop
    assert start == L_total

    for (Lp, Jp), segs in buckets.items():
        TJ = min(Jp, J_TILE)
        JB = Jp // TJ
        S_b = len(segs)

        # ---- batch tile: stack TB batch elements into the MXU M-dim --------
        TB = _align_tb(min(max(1, rows_target // max(Cout, 1)), N), Cout)

        def footprint(tb):
            rows_ = tb * Cout
            xw_bufs = 1 if JB > 1 else 2   # xw single-buffered only when j-invariant helps
            return (xw_bufs * rows_ * (2 * Lp) * 2      # xw (bf16)
                    + 2 * (2 * Lp) * TJ * 2             # a_cat (bf16)
                    + 2 * TJ * Lp * 2                   # ae (bf16)
                    + 2 * Lp * 4                        # inv (f32)
                    + 2 * rows_ * Lp * jnp.dtype(out_dtype).itemsize
                    + rows_ * Lp * 4)                   # f32 accumulator scratch

        while footprint(TB) > vmem_budget and TB > 1:
            nxt = _align_tb(TB // 2, Cout)
            if nxt >= TB:
                break
            TB = nxt

        rows = TB * Cout
        N_pad = _round_up(N, TB)
        NB = N_pad // TB
        # never request the full physical VMEM (v7x is only 64 MiB per TC)
        vmem_limit = int(min(max(32 * 1024 * 1024, footprint(TB) + 8 * 1024 * 1024),
                             vmem_cap - 8 * 1024 * 1024))

        # ---- per-segment operand staging (already bf16 before padding) -----
        xw_list, aT_list, ae_list, inv_list = [], [], [], []
        for (_, seg_start, L_d, J_d, adj) in segs:
            x0 = jnp.pad(xw0[:, :, seg_start:seg_start + L_d],
                         ((0, N_pad - N), (0, 0), (0, Lp - L_d)))
            x1 = jnp.pad(xw1[:, :, seg_start:seg_start + L_d],
                         ((0, N_pad - N), (0, 0), (0, Lp - L_d)))
            xw_list.append(jnp.concatenate(
                [x0.reshape(N_pad * Cout, Lp), x1.reshape(N_pad * Cout, Lp)], axis=-1))

            adj_f = adj.astype(jnp.float32)
            ae = adj_f[0::2, :]                        # (J_d, L_d)
            ao = adj_f[1::2, :]
            aeT = jnp.pad(ae.T, ((0, Lp - L_d), (0, Jp - J_d)))
            aoT = jnp.pad(ao.T, ((0, Lp - L_d), (0, Jp - J_d)))
            aT_list.append(jnp.concatenate([aeT, aoT], axis=0).astype(cdt))   # (2Lp, Jp)
            ae_list.append(jnp.pad(ae, ((0, Jp - J_d), (0, Lp - L_d))).astype(cdt))
            col = jnp.sum(adj_f, axis=0)
            inv = 1.0 / jnp.where(col == 0.0, 1.0, col)
            inv_list.append(jnp.pad(inv, (0, Lp - L_d))[None, :])             # (1, Lp) f32

        xw_st = jnp.stack(xw_list)        # (S_b, N_pad*Cout, 2*Lp) bf16
        aT_st = jnp.stack(aT_list)        # (S_b, 2*Lp, Jp)         bf16 exact 0/1
        ae_st = jnp.stack(ae_list)        # (S_b, Jp, Lp)           bf16 exact 0/1
        inv_st = jnp.stack(inv_list)      # (S_b, 1, Lp)            f32

        def run(single_buffer):
            def spec(shape, imap, j_invariant=False):
                if single_buffer and j_invariant and JB > 1:
                    # grid-invariant along the inner j axis -> no benefit from a
                    # second buffer; frees rows*2*Lp*2 bytes of VMEM (v7x win).
                    return pl.BlockSpec(shape, imap, pipeline_mode=pl.Buffered(1))
                return pl.BlockSpec(shape, imap)

            return pl.pallas_call(
                _adj_conv_kernel,
                out_shape=jax.ShapeDtypeStruct((S_b, N_pad * Cout, Lp), out_dtype),
                grid=(S_b, NB, JB),
                in_specs=[
                    spec((1, rows, 2 * Lp), lambda s, b, j: (s, b, 0), j_invariant=True),
                    spec((1, 2 * Lp, TJ), lambda s, b, j: (s, 0, j)),
                    spec((1, TJ, Lp), lambda s, b, j: (s, j, 0)),
                    spec((1, 1, Lp), lambda s, b, j: (s, 0, 0)),
                ],
                out_specs=pl.BlockSpec((1, rows, Lp), lambda s, b, j: (s, b, 0)),
                scratch_shapes=[pltpu.VMEM((rows, Lp), jnp.float32)],
                compiler_params=pltpu.CompilerParams(
                    # segment axis parallel (v7x megacore shards over distinct
                    # adjacency blocks); j is the accumulated reduction axis.
                    dimension_semantics=("parallel", "arbitrary", "arbitrary"),
                    vmem_limit_bytes=vmem_limit,
                ),
            )(xw_st, aT_st, ae_st, inv_st)

        try:
            out = run(single_buffer=True)
        except Exception:
            # pl.Buffered(1) unsupported on this JAX build: fall back to defaults.
            out = run(single_buffer=False)

        out = out.reshape(S_b, N_pad, Cout, Lp)[:, :N]
        for idx, (d, _, L_d, _, _) in enumerate(segs):
            pieces[d] = out[idx, :, :, :L_d]

    return jnp.concatenate(pieces, axis=2)


def _reference(x, adjs, weight):
    """Pure-JAX f32 reference mirroring the PyTorch math (independent formulation)."""
    outs = []
    start = 0
    for adj in adjs:
        m, l_d = adj.shape
        xd = x[:, :, start:start + l_d]
        y1 = jnp.einsum("ncl,ml->ncm", xd, adj)
        y1r = y1.reshape(y1.shape[0], y1.shape[1], m // 2, 2)
        y2 = jnp.einsum("ock,ncjk->noj", weight, y1r)   # Conv1d(k=2, s=2, no bias)
        y3 = jnp.einsum("noj,jl->nol", y2, adj[0::2, :])
        s = adj.sum(axis=0)
        s = jnp.where(s == 0, 1.0, s)
        outs.append(y3 / s[None, None, :])
        start += l_d
    return jnp.concatenate(outs, axis=2)


if __name__ == "__main__":
    key = jax.random.PRNGKey(0)
    k_x, k_adj, k_w = jax.random.split(key, 3)

    N, Cin, Cout = 2, 4, 4
    seg_specs = [(16, 16), (8, 24)]          # (M_d, L_d) per adjacency segment
    L_total = sum(l for _, l in seg_specs)   # 40

    x = jax.random.normal(k_x, (N, Cin, L_total), dtype=jnp.float32)
    adjs = [jax.random.bernoulli(kk, 0.3, (m, l)).astype(jnp.float32)
            for (m, l), kk in zip(seg_specs, jax.random.split(k_adj, len(seg_specs)))]
    # Deterministic synthetic Conv1d weight: (out_channels, in_channels, kernel_size=2)
    weight = 0.1 * jax.random.normal(k_w, (Cout, Cin, 2), dtype=jnp.float32)

    out = jax.block_until_ready(adjacency_conv(x, adjs, weight))
    ref = _reference(x, adjs, weight)

    assert out.shape == (N, Cout, L_total)
    # bf16 MXU inputs (f32 accumulation, f32 normalization) vs f32 reference.
    assert bool(jnp.allclose(out, ref, atol=2e-2, rtol=2e-2)), "mismatch vs reference"

    print("KERNEL_OK")
</pallas_src>

<mosaic_0001>
module attributes {stable_mosaic.version = 11 : i64} {
  func.func @_adj_conv_kernel(%arg0: i32, %arg1: i32, %arg2: i32, %arg3: memref<1x16x256xbf16, #tpu.memory_space<vmem>>, %arg4: memref<1x256x8xbf16, #tpu.memory_space<vmem>>, %arg5: memref<1x8x128xbf16, #tpu.memory_space<vmem>>, %arg6: memref<1x1x128xf32, #tpu.memory_space<vmem>>, %arg7: memref<1x16x128xf32, #tpu.memory_space<vmem>>, %arg8: memref<16x128xf32, #tpu.memory_space<vmem>>) attributes {dimension_semantics = [#tpu.dimension_semantics<parallel>, #tpu.dimension_semantics<arbitrary>, #tpu.dimension_semantics<arbitrary>], iteration_bounds = array<i64: 2, 1, 1>, scalar_prefetch = 0 : i64, scratch_operands = 1 : i64, tpu.core_type = #tpu.core_type<tc>, window_params = [{transform_indices = @transform_0, window_bounds = array<i64: 1, 16, 256>}, {transform_indices = @transform_1, window_bounds = array<i64: 1, 256, 8>}, {transform_indices = @transform_2, window_bounds = array<i64: 1, 8, 128>}, {transform_indices = @transform_3, window_bounds = array<i64: 1, 1, 128>}, {transform_indices = @transform_4, window_bounds = array<i64: 1, 16, 128>}]} {
    %c0_i32 = arith.constant 0 : i32
    %0 = arith.cmpi eq, %arg2, %c0_i32 : i32
    %1 = arith.extui %0 : i1 to i32
    %c0_i32_0 = arith.constant 0 : i32
    %2 = arith.cmpi ne, %1, %c0_i32_0 : i32
    scf.if %2 {
      %cst_16 = arith.constant 0.000000e+00 : f32
      %18 = vector.broadcast %cst_16 : f32 to vector<16x128xf32>
      %c0_17 = arith.constant 0 : index
      %c0_18 = arith.constant 0 : index
      %19 = vector.load %arg8[%c0_17, %c0_18] : memref<16x128xf32, #tpu.memory_space<vmem>>, vector<16x128xf32>
      tpu.vector_store %arg8[%c0_17, %c0_18], %18 {strides = array<i32>} : memref<16x128xf32, #tpu.memory_space<vmem>>, vector<16x128xf32>,
    } else {
    }
    %c0 = arith.constant 0 : index
    %c0_1 = arith.constant 0 : index
    %c0_2 = arith.constant 0 : index
    %3 = vector.load %arg3[%c0, %c0_1, %c0_2] : memref<1x16x256xbf16, #tpu.memory_space<vmem>>, vector<1x16x256xbf16>
    %4 = vector.shape_cast %3 : vector<1x16x256xbf16> to vector<16x256xbf16>
    %c0_3 = arith.constant 0 : index
    %c0_4 = arith.constant 0 : index
    %c0_5 = arith.constant 0 : index
    %5 = vector.load %arg4[%c0_3, %c0_4, %c0_5] : memref<1x256x8xbf16, #tpu.memory_space<vmem>>, vector<1x256x8xbf16>
    %6 = vector.shape_cast %5 : vector<1x256x8xbf16> to vector<256x8xbf16>
    %cst = arith.constant dense<0.000000e+00> : vector<16x8xf32>
    %7 = tpu.matmul %4, %6, %cst {dimension_numbers = #tpu.dot_dimension_numbers<[1], [0], [0], [1], [0, 0, 1, 1], [], []>} : vector<16x256xbf16>, vector<256x8xbf16>, vector<16x8xf32> -> vector<16x8xf32>
    %c0_6 = arith.constant 0 : index
    %c0_7 = arith.constant 0 : index
    %8 = vector.load %arg8[%c0_6, %c0_7] : memref<16x128xf32, #tpu.memory_space<vmem>>, vector<16x128xf32>
    %9 = arith.truncf %7 : vector<16x8xf32> to vector<16x8xbf16>
    %c0_8 = arith.constant 0 : index
    %c0_9 = arith.constant 0 : index
    %c0_10 = arith.constant 0 : index
    %10 = vector.load %arg5[%c0_8, %c0_9, %c0_10] : memref<1x8x128xbf16, #tpu.memory_space<vmem>>, vector<1x8x128xbf16>
    %11 = vector.shape_cast %10 : vector<1x8x128xbf16> to vector<8x128xbf16>
    %cst_11 = arith.constant dense<0.000000e+00> : vector<16x128xf32>
    %12 = tpu.matmul %9, %11, %cst_11 {dimension_numbers = #tpu.dot_dimension_numbers<[1], [0], [0], [1], [0, 0, 1, 1], [], []>} : vector<16x8xbf16>, vector<8x128xbf16>, vector<16x128xf32> -> vector<16x128xf32>
    %13 = arith.addf %8, %12 : vector<16x128xf32>
    %c0_12 = arith.constant 0 : index
    %c0_13 = arith.constant 0 : index
    %14 = vector.load %arg8[%c0_12, %c0_13] : memref<16x128xf32, #tpu.memory_space<vmem>>, vector<16x128xf32>
    tpu.vector_store %arg8[%c0_12, %c0_13], %13 {strides = array<i32>} : memref<16x128xf32, #tpu.memory_space<vmem>>, vector<16x128xf32>,
    %c0_i32_14 = arith.constant 0 : i32
    %15 = arith.cmpi eq, %arg2, %c0_i32_14 : i32
    %16 = arith.extui %15 : i1 to i32
    %c0_i32_15 = arith.constant 0 : i32
    %17 = arith.cmpi ne, %16, %c0_i32_15 : i32
    scf.if %17 {
      %c0_16 = arith.constant 0 : index
      %c0_17 = arith.constant 0 : index
      %18 = vector.load %arg8[%c0_16, %c0_17] : memref<16x128xf32, #tpu.memory_space<vmem>>, vector<16x128xf32>
      %c0_18 = arith.constant 0 : index
      %c0_19 = arith.constant 0 : index
      %c0_20 = arith.constant 0 : index
      %19 = vector.load %arg6[%c0_18, %c0_19, %c0_20] : memref<1x1x128xf32, #tpu.memory_space<vmem>>, vector<1x1x128xf32>
      %20 = vector.shape_cast %19 : vector<1x1x128xf32> to vector<1x128xf32>
      %21 = vector.broadcast %20 : vector<1x128xf32> to vector<16x128xf32>
      %22 = arith.mulf %18, %21 : vector<16x128xf32>
      %c0_21 = arith.constant 0 : index
      %c0_22 = arith.constant 0 : index
      %c0_23 = arith.constant 0 : index
      %23 = vector.load %arg7[%c0_21, %c0_22, %c0_23] : memref<1x16x128xf32, #tpu.memory_space<vmem>>, vector<1x16x128xf32>
      %24 = vector.shape_cast %23 : vector<1x16x128xf32> to vector<16x128xf32>
      %25 = vector.shape_cast %22 : vector<16x128xf32> to vector<1x16x128xf32>
      tpu.vector_store %arg7[%c0_21, %c0_22, %c0_23], %25 {strides = array<i32>} : memref<1x16x128xf32, #tpu.memory_space<vmem>>, vector<1x16x128xf32>,
    } else {
    }
    return
  }
  func.func @transform_0(%arg0: i32, %arg1: i32, %arg2: i32) -> (i32, i32, i32) {
    %c0_i32 = arith.constant 0 : i32
    %c0_i32_0 = arith.constant 0 : i32
    return %arg0, %arg1, %c0_i32 : i32, i32, i32
  }
  func.func @transform_1(%arg0: i32, %arg1: i32, %arg2: i32) -> (i32, i32, i32) {
    %c0_i32 = arith.constant 0 : i32
    %c0_i32_0 = arith.constant 0 : i32
    return %arg0, %c0_i32, %arg2 : i32, i32, i32
  }
  func.func @transform_2(%arg0: i32, %arg1: i32, %arg2: i32) -> (i32, i32, i32) {
    %c0_i32 = arith.constant 0 : i32
    %c0_i32_0 = arith.constant 0 : i32
    return %arg0, %arg2, %c0_i32 : i32, i32, i32
  }
  func.func @transform_3(%arg0: i32, %arg1: i32, %arg2: i32) -> (i32, i32, i32) {
    %c0_i32 = arith.constant 0 : i32
    %c0_i32_0 = arith.constant 0 : i32
    %c0_i32_1 = arith.constant 0 : i32
    return %arg0, %c0_i32, %c0_i32_0 : i32, i32, i32
  }
  func.func @transform_4(%arg0: i32, %arg1: i32, %arg2: i32) -> (i32, i32, i32) {
    %c0_i32 = arith.constant 0 : i32
    %c0_i32_0 = arith.constant 0 : i32
    return %arg0, %arg1, %c0_i32 : i32, i32, i32
  }
}

module attributes {stable_mosaic.version = 11 : i64} {
  func.func @_adj_conv_kernel(%arg0: i32, %arg1: i32, %arg2: i32, %arg3: memref<1x16x256xbf16, #tpu.memory_space<vmem>>, %arg4: memref<1x256x8xbf16, #tpu.memory_space<vmem>>, %arg5: memref<1x8x128xbf16, #tpu.memory_space<vmem>>, %arg6: memref<1x1x128xf32, #tpu.memory_space<vmem>>, %arg7: memref<1x16x128xf32, #tpu.memory_space<vmem>>, %arg8: memref<16x128xf32, #tpu.memory_space<vmem>>) attributes {dimension_semantics = [#tpu.dimension_semantics<parallel>, #tpu.dimension_semantics<arbitrary>, #tpu.dimension_semantics<arbitrary>], iteration_bounds = array<i64: 2, 1, 1>, scalar_prefetch = 0 : i64, scratch_operands = 1 : i64, tpu.core_type = #tpu.core_type<tc>, window_params = [{transform_indices = @transform_0, window_bounds = array<i64: 1, 16, 256>}, {transform_indices = @transform_1, window_bounds = array<i64: 1, 256, 8>}, {transform_indices = @transform_2, window_bounds = array<i64: 1, 8, 128>}, {transform_indices = @transform_3, window_bounds = array<i64: 1, 1, 128>}, {transform_indices = @transform_4, window_bounds = array<i64: 1, 16, 128>}]} {
    %c0_i32 = arith.constant 0 : i32
    %0 = arith.cmpi eq, %arg2, %c0_i32 : i32
    %1 = arith.extui %0 : i1 to i32
    %c0_i32_0 = arith.constant 0 : i32
    %2 = arith.cmpi ne, %1, %c0_i32_0 : i32
    scf.if %2 {
      %cst_16 = arith.constant 0.000000e+00 : f32
      %18 = vector.broadcast %cst_16 : f32 to vector<16x128xf32>
      %c0_17 = arith.constant 0 : index
      %c0_18 = arith.constant 0 : index
      %19 = vector.load %arg8[%c0_17, %c0_18] : memref<16x128xf32, #tpu.memory_space<vmem>>, vector<16x128xf32>
      tpu.vector_store %arg8[%c0_17, %c0_18], %18 {strides = array<i32>} : memref<16x128xf32, #tpu.memory_space<vmem>>, vector<16x128xf32>,
    } else {
    }
    %c0 = arith.constant 0 : index
    %c0_1 = arith.constant 0 : index
    %c0_2 = arith.constant 0 : index
    %3 = vector.load %arg3[%c0, %c0_1, %c0_2] : memref<1x16x256xbf16, #tpu.memory_space<vmem>>, vector<1x16x256xbf16>
    %4 = vector.shape_cast %3 : vector<1x16x256xbf16> to vector<16x256xbf16>
    %c0_3 = arith.constant 0 : index
    %c0_4 = arith.constant 0 : index
    %c0_5 = arith.constant 0 : index
    %5 = vector.load %arg4[%c0_3, %c0_4, %c0_5] : memref<1x256x8xbf16, #tpu.memory_space<vmem>>, vector<1x256x8xbf16>
    %6 = vector.shape_cast %5 : vector<1x256x8xbf16> to vector<256x8xbf16>
    %cst = arith.constant dense<0.000000e+00> : vector<16x8xf32>
    %7 = tpu.matmul %4, %6, %cst {dimension_numbers = #tpu.dot_dimension_numbers<[1], [0], [0], [1], [0, 0, 1, 1], [], []>} : vector<16x256xbf16>, vector<256x8xbf16>, vector<16x8xf32> -> vector<16x8xf32>
    %c0_6 = arith.constant 0 : index
    %c0_7 = arith.constant 0 : index
    %8 = vector.load %arg8[%c0_6, %c0_7] : memref<16x128xf32, #tpu.memory_space<vmem>>, vector<16x128xf32>
    %9 = arith.truncf %7 : vector<16x8xf32> to vector<16x8xbf16>
    %c0_8 = arith.constant 0 : index
    %c0_9 = arith.constant 0 : index
    %c0_10 = arith.constant 0 : index
    %10 = vector.load %arg5[%c0_8, %c0_9, %c0_10] : memref<1x8x128xbf16, #tpu.memory_space<vmem>>, vector<1x8x128xbf16>
    %11 = vector.shape_cast %10 : vector<1x8x128xbf16> to vector<8x128xbf16>
    %cst_11 = arith.constant dense<0.000000e+00> : vector<16x128xf32>
    %12 = tpu.matmul %9, %11, %cst_11 {dimension_numbers = #tpu.dot_dimension_numbers<[1], [0], [0], [1], [0, 0, 1, 1], [], []>} : vector<16x8xbf16>, vector<8x128xbf16>, vector<16x128xf32> -> vector<16x128xf32>
    %13 = arith.addf %8, %12 : vector<16x128xf32>
    %c0_12 = arith.constant 0 : index
    %c0_13 = arith.constant 0 : index
    %14 = vector.load %arg8[%c0_12, %c0_13] : memref<16x128xf32, #tpu.memory_space<vmem>>, vector<16x128xf32>
    tpu.vector_store %arg8[%c0_12, %c0_13], %13 {strides = array<i32>} : memref<16x128xf32, #tpu.memory_space<vmem>>, vector<16x128xf32>,
    %c0_i32_14 = arith.constant 0 : i32
    %15 = arith.cmpi eq, %arg2, %c0_i32_14 : i32
    %16 = arith.extui %15 : i1 to i32
    %c0_i32_15 = arith.constant 0 : i32
    %17 = arith.cmpi ne, %16, %c0_i32_15 : i32
    scf.if %17 {
      %c0_16 = arith.constant 0 : index
      %c0_17 = arith.constant 0 : index
      %18 = vector.load %arg8[%c0_16, %c0_17] : memref<16x128xf32, #tpu.memory_space<vmem>>, vector<16x128xf32>
      %c0_18 = arith.constant 0 : index
      %c0_19 = arith.constant 0 : index
      %c0_20 = arith.constant 0 : index
      %19 = vector.load %arg6[%c0_18, %c0_19, %c0_20] : memref<1x1x128xf32, #tpu.memory_space<vmem>>, vector<1x1x128xf32>
      %20 = vector.shape_cast %19 : vector<1x1x128xf32> to vector<1x128xf32>
      %21 = vector.broadcast %20 : vector<1x128xf32> to vector<16x128xf32>
      %22 = arith.mulf %18, %21 : vector<16x128xf32>
      %c0_21 = arith.constant 0 : index
      %c0_22 = arith.constant 0 : index
      %c0_23 = arith.constant 0 : index
      %23 = vector.load %arg7[%c0_21, %c0_22, %c0_23] : memref<1x16x128xf32, #tpu.memory_space<vmem>>, vector<1x16x128xf32>
      %24 = vector.shape_cast %23 : vector<1x16x128xf32> to vector<16x128xf32>
      %25 = vector.shape_cast %22 : vector<16x128xf32> to vector<1x16x128xf32>
      tpu.vector_store %arg7[%c0_21, %c0_22, %c0_23], %25 {strides = array<i32>} : memref<1x16x128xf32, #tpu.memory_space<vmem>>, vector<1x16x128xf32>,
    } else {
    }
    return
  }
  func.func @transform_0(%arg0: i32, %arg1: i32, %arg2: i32) -> (i32, i32, i32) {
    %c0_i32 = arith.constant 0 : i32
    %c0_i32_0 = arith.constant 0 : i32
    return %arg0, %arg1, %c0_i32 : i32, i32, i32
  }
  func.func @transform_1(%arg0: i32, %arg1: i32, %arg2: i32) -> (i32, i32, i32) {
    %c0_i32 = arith.constant 0 : i32
    %c0_i32_0 = arith.constant 0 : i32
    return %arg0, %c0_i32, %arg2 : i32, i32, i32
  }
  func.func @transform_2(%arg0: i32, %arg1: i32, %arg2: i32) -> (i32, i32, i32) {
    %c0_i32 = arith.constant 0 : i32
    %c0_i32_0 = arith.constant 0 : i32
    return %arg0, %arg2, %c0_i32 : i32, i32, i32
  }
  func.func @transform_3(%arg0: i32, %arg1: i32, %arg2: i32) -> (i32, i32, i32) {
    %c0_i32 = arith.constant 0 : i32
    %c0_i32_0 = arith.constant 0 : i32
    %c0_i32_1 = arith.constant 0 : i32
    return %arg0, %c0_i32, %c0_i32_0 : i32, i32, i32
  }
  func.func @transform_4(%arg0: i32, %arg1: i32, %arg2: i32) -> (i32, i32, i32) {
    %c0_i32 = arith.constant 0 : i32
    %c0_i32_0 = arith.constant 0 : i32
    return %arg0, %arg1, %c0_i32 : i32, i32, i32
  }
}

</mosaic_0001>

<llo_original>
// kernel: tpu_custom_call.1
$region0: #{tpu_custom_call.1}
  #allocation0 [shape = 'u32[]', space=smem, size = 0x4, offset = 0x4, fixed_abs, tag = 'smem constant byte address 0x4 - core index']
  #allocation1 [shape = 'u32[72,128]{1,0:T(1,128)}', space=vmem, size = 0x9000, scoped, tag = 'internal scratch']
  #allocation2 [shape = 'f32[16,128]{1,0:T(8,128)}', space=vmem, size = 0x2000, scoped, tag = 'scratch operand']
  %s0 = inlined_call_operand.vmem [shape: bf16[2,16,256], index: 0, kind: input, shape index: {}]
  %s1 = inlined_call_operand.vmem [shape: bf16[2,256,8], index: 1, kind: input, shape index: {}]
  %s2 = inlined_call_operand.vmem [shape: bf16[2,8,128], index: 2, kind: input, shape index: {}]
  %s3 = inlined_call_operand.vmem [shape: f32[2,1,128], index: 3, kind: input, shape index: {}]
  %s4 = inlined_call_operand.hbm [shape: f32[2,16,128], index: 4, kind: output, shape index: {}]
  %s5 = sld [smem:[#allocation0]]
  $region57: #{tpu_custom_call.1} parent=0
    _
  %s7 = ssub.s32 1, %s5
  %s8 = scalar_select 0, %s7, %s5
  $region1: #{tpu_custom_call.1} parent=0
    #allocation3 [shape = 'u8[16384]{0}', space=vmem, size = 0x4000, scoped, tag = 'output window, operand 0']
    #allocation4 [shape = 's32[2]{0}', space=sflag, size = 0x8, scoped, tag = 'scoped memory for tpu_custom_call.1']
    %9 = vsyncpa [#allocation4], 0
    %s10 = scalar_lea.sflag [#allocation4], 1
    %11 = vsyncpa %s10, 0
    loop: start=0, step=1, limit=4
    $region2: #{tpu_custom_call.1} parent=1 // loop_pre_header
      _
    $region3: #{tpu_custom_call.1} parent=1 // loop_header
      %s13 = sphi 0, %s17
      %p14 = scmp.ge.s32.totalorder %s13, 4
      %s20 = sphi 0, %s39
      %s21 = sphi 0, %s35
      %s22 = sphi 0, %s31
      %s23 = sphi 0, %s20
      %s24 = sphi 0, %s21
      %s25 = sphi 0, %s22
      %s26 = sphi 0, %s23
      %s27 = sphi 0, %s24
      %s28 = sphi 0, %s25
      %s44 = sphi 0, %s46
      %s47 = sphi 0, %s44
      %s48 = sphi 0, %s47
      %s64 = sphi 0, %s48
      %s72 = sphi 0, %s74
      %s75 = sphi 0, %s72
      %s76 = sphi 0, %s75
      %s92 = sphi 0, %s76
      %s100 = sphi 0, %s102
      %s103 = sphi 0, %s100
      %s104 = sphi 0, %s103
      %s120 = sphi 0, %s104
      %s126 = sphi 0, %s128
      %s129 = sphi 0, %s126
      %s130 = sphi 0, %s129
      %s146 = sphi 0, %s130
      %s154 = sphi 0, %s156
      %s157 = sphi 0, %s154
      %s158 = sphi 0, %s157
      %s174 = sphi 0, %s158
    $region4: #{tpu_custom_call.1} parent=1 // loop_header_branch
      %16 = sbr.rel (%p14) target = $region8
    $region5: #{tpu_custom_call.1} parent=1 // loop_body
      %s18 = ssub.s32 %s13, 1
      %s19 = ssub.s32 %s13, 2
      %s29 = sadd.s32 1, %s22
      %p30 = scmp.ge.s32.totalorder %s29, 1
      %s31 = scalar_select %p30, 0, %s29
      %s32 = sadd.s32 1, %s21
      %s33 = scalar_select %p30, %s32, %s21
      %p34 = scmp.ge.s32.totalorder %s33, 1
      %s35 = scalar_select %p34, 0, %s33
      %s36 = sadd.s32 1, %s20
      %s37 = scalar_select %p34, %s36, %s20
      %p38 = scmp.ge.s32.totalorder %s37, 2
      %s39 = scalar_select %p38, 0, %s37
      %s40 = ssub.s32 %s20, %s39
      %s41 = ssub.s32 %s21, %s35
      %s42 = sor.u32 %s40, %s41
      %p43 = scmp.eq.s32.totalorder %s42, 0
      %s45 = sadd.s32 %s44, 1
      %s46 = scalar_select %p43, %s44, %s45
      %p49 = pneg %p43
      %p50 = scmp.eq.s32.totalorder %s13, 1
      %p51 = por %p49, %p50
      %p52 = scmp.ne.s32.totalorder %s44, %s47
      %p53 = scmp.eq.s32.totalorder %s13, 0
      %p54 = por %p52, %p53
      %p55 = scmp.ne.s32.totalorder %s44, %s47
      %p56 = scmp.eq.s32.totalorder %s18, 1
      %p57 = por %p55, %p56
      %p58 = scmp.ne.s32.totalorder %s47, %s48
      %p59 = scmp.eq.s32.totalorder %s18, 0
      %p60 = por %p58, %p59
      %p61 = scmp.ne.s32.totalorder %s47, %s48
      %p62 = scmp.eq.s32.totalorder %s19, 1
      %p63 = por %p61, %p62
      %p65 = scmp.ne.s32.totalorder %s48, %s64
      %p66 = scmp.eq.s32.totalorder %s19, 0
      %p67 = por %p65, %p66
      %s68 = ssub.s32 %s20, %s39
      %s69 = ssub.s32 %s22, %s31
      %s70 = sor.u32 %s68, %s69
      %p71 = scmp.eq.s32.totalorder %s70, 0
      %s73 = sadd.s32 %s72, 1
      %s74 = scalar_select %p71, %s72, %s73
      %p77 = pneg %p71
      %p78 = scmp.eq.s32.totalorder %s13, 1
      %p79 = por %p77, %p78
      %p80 = scmp.ne.s32.totalorder %s72, %s75
      %p81 = scmp.eq.s32.totalorder %s13, 0
      %p82 = por %p80, %p81
      %p83 = scmp.ne.s32.totalorder %s72, %s75
      %p84 = scmp.eq.s32.totalorder %s18, 1
      %p85 = por %p83, %p84
      %p86 = scmp.ne.s32.totalorder %s75, %s76
      %p87 = scmp.eq.s32.totalorder %s18, 0
      %p88 = por %p86, %p87
      %p89 = scmp.ne.s32.totalorder %s75, %s76
      %p90 = scmp.eq.s32.totalorder %s19, 1
      %p91 = por %p89, %p90
      %p93 = scmp.ne.s32.totalorder %s76, %s92
      %p94 = scmp.eq.s32.totalorder %s19, 0
      %p95 = por %p93, %p94
      %s96 = ssub.s32 %s20, %s39
      %s97 = ssub.s32 %s22, %s31
      %s98 = sor.u32 %s96, %s97
      %p99 = scmp.eq.s32.totalorder %s98, 0
      %s101 = sadd.s32 %s100, 1
      %s102 = scalar_select %p99, %s100, %s101
      %p105 = pneg %p99
      %p106 = scmp.eq.s32.totalorder %s13, 1
      %p107 = por %p105, %p106
      %p108 = scmp.ne.s32.totalorder %s100, %s103
      %p109 = scmp.eq.s32.totalorder %s13, 0
      %p110 = por %p108, %p109
      %p111 = scmp.ne.s32.totalorder %s100, %s103
      %p112 = scmp.eq.s32.totalorder %s18, 1
      %p113 = por %p111, %p112
      %p114 = scmp.ne.s32.totalorder %s103, %s104
      %p115 = scmp.eq.s32.totalorder %s18, 0
      %p116 = por %p114, %p115
      %p117 = scmp.ne.s32.totalorder %s103, %s104
      %p118 = scmp.eq.s32.totalorder %s19, 1
      %p119 = por %p117, %p118
      %p121 = scmp.ne.s32.totalorder %s104, %s120
      %p122 = scmp.eq.s32.totalorder %s19, 0
      %p123 = por %p121, %p122
      %s124 = ssub.s32 %s20, %s39
      %p125 = scmp.eq.s32.totalorder %s124, 0
      %s127 = sadd.s32 %s126, 1
      %s128 = scalar_select %p125, %s126, %s127
      %p131 = pneg %p125
      %p132 = scmp.eq.s32.totalorder %s13, 1
      %p133 = por %p131, %p132
      %p134 = scmp.ne.s32.totalorder %s126, %s129
      %p135 = scmp.eq.s32.totalorder %s13, 0
      %p136 = por %p134, %p135
      %p137 = scmp.ne.s32.totalorder %s126, %s129
      %p138 = scmp.eq.s32.totalorder %s18, 1
      %p139 = por %p137, %p138
      %p140 = scmp.ne.s32.totalorder %s129, %s130
      %p141 = scmp.eq.s32.totalorder %s18, 0
      %p142 = por %p140, %p141
      %p143 = scmp.ne.s32.totalorder %s129, %s130
      %p144 = scmp.eq.s32.totalorder %s19, 1
      %p145 = por %p143, %p144
      %p147 = scmp.ne.s32.totalorder %s130, %s146
      %p148 = scmp.eq.s32.totalorder %s19, 0
      %p149 = por %p147, %p148
      %s150 = ssub.s32 %s20, %s39
      %s151 = ssub.s32 %s21, %s35
      %s152 = sor.u32 %s150, %s151
      %p153 = scmp.eq.s32.totalorder %s152, 0
      %s155 = sadd.s32 %s154, 1
      %s156 = scalar_select %p153, %s154, %s155
      %p159 = pneg %p153
      %p160 = scmp.eq.s32.totalorder %s13, 1
      %p161 = por %p159, %p160
      %p162 = scmp.ne.s32.totalorder %s154, %s157
      %p163 = scmp.eq.s32.totalorder %s13, 0
      %p164 = por %p162, %p163
      %p165 = scmp.ne.s32.totalorder %s154, %s157
      %p166 = scmp.eq.s32.totalorder %s18, 1
      %p167 = por %p165, %p166
      %p168 = scmp.ne.s32.totalorder %s157, %s158
      %p169 = scmp.eq.s32.totalorder %s18, 0
      %p170 = por %p168, %p169
      %p171 = scmp.ne.s32.totalorder %s157, %s158
      %p172 = scmp.eq.s32.totalorder %s19, 1
      %p173 = por %p171, %p172
      %p175 = scmp.ne.s32.totalorder %s158, %s174
      %p176 = scmp.eq.s32.totalorder %s19, 0
      %p177 = por %p175, %p176
      %p178 = scmp.le.s32.totalorder 1, %s13
      %p179 = scmp.lt.s32.totalorder %s13, 3
      %p180 = pnand %p178, %p179
      %p181 = pneg %p180
      // Predicated region
      $region9: #{tpu_custom_call.1} parent=5 // pred_check
        _
      $region10: #{tpu_custom_call.1} parent=5 // pred_check_branch
        %183 = sbr.rel (%p180) target = $region12
      $region11: #{tpu_custom_call.1} parent=5 // pred_region
        %s184 = ssub.s32 %s13, 1
      $region12: #{tpu_custom_call.1} parent=5 // pred_fallthru
        _
      %p185 = scmp.lt.s32.totalorder %s13, 2
      // Predicated region
      $region13: #{tpu_custom_call.1} parent=5 // pred_check
        %p186 = pneg %p185
      $region14: #{tpu_custom_call.1} parent=5 // pred_check_branch
        %188 = sbr.rel (%p186) target = $region16
      $region15: #{tpu_custom_call.1} parent=5 // pred_region
        // Predicated region
        $region17: #{tpu_custom_call.1} parent=15 // pred_check
          %p189 = pneg %p54
        $region18: #{tpu_custom_call.1} parent=15 // pred_check_branch
          %191 = sbr.rel (%p189) target = $region20
        $region19: #{tpu_custom_call.1} parent=15 // pred_region
          %s192 = smul.u32 2, %s21
          %p193 = scmp.lt.s32.totalorder %s20, 1
          %s194 = scalar_select %p193, %s20, 1
          %p195 = scmp.lt.s32.totalorder %s192, 1
          %s196 = scalar_select %p195, %s192, 1
          %s197 = smul.addr %s196, 2
          %s198 = smul.addr %s194, 4
          %s199 = sadd.s32 %s197, %s198
          %s200 = smul.addr %s199, 4
          %s201 = scalar_lea.vmem %s0, %s200
          %s202 = smul.u32 2, %s21
        $region20: #{tpu_custom_call.1} parent=15 // pred_fallthru
          _
        // Predicated region
        $region21: #{tpu_custom_call.1} parent=15 // pred_check
          %p203 = pneg %p82
        $region22: #{tpu_custom_call.1} parent=15 // pred_check_branch
          %205 = sbr.rel (%p203) target = $region24
        $region23: #{tpu_custom_call.1} parent=15 // pred_region
          %p206 = scmp.lt.s32.totalorder %s20, 1
          %s207 = scalar_select %p206, %s20, 1
          %p208 = scmp.lt.s32.totalorder %s22, 0
          %s209 = scalar_select %p208, %s22, 0
          %s210 = smul.addr %s207, 32
          %s211 = sadd.s32 %s209, %s210
          %s212 = smul.addr %s211, 4
          %s213 = scalar_lea.vmem %s1, %s212
        $region24: #{tpu_custom_call.1} parent=15 // pred_fallthru
          _
        // Predicated region
        $region25: #{tpu_custom_call.1} parent=15 // pred_check
          %p214 = pneg %p110
        $region26: #{tpu_custom_call.1} parent=15 // pred_check_branch
          %216 = sbr.rel (%p214) target = $region28
        $region27: #{tpu_custom_call.1} parent=15 // pred_region
          %p217 = scmp.lt.s32.totalorder %s20, 1
          %s218 = scalar_select %p217, %s20, 1
          %p219 = scmp.lt.s32.totalorder %s22, 0
          %s220 = scalar_select %p219, %s22, 0
          %s221 = sadd.s32 %s220, %s218
          %s222 = smul.addr %s221, 4
          %s223 = scalar_lea.vmem %s2, %s222
        $region28: #{tpu_custom_call.1} parent=15 // pred_fallthru
          _
        // Predicated region
        $region29: #{tpu_custom_call.1} parent=15 // pred_check
          %p224 = pneg %p136
        $region30: #{tpu_custom_call.1} parent=15 // pred_check_branch
          %226 = sbr.rel (%p224) target = $region32
        $region31: #{tpu_custom_call.1} parent=15 // pred_region
          %p227 = scmp.lt.s32.totalorder %s20, 1
          %s228 = scalar_select %p227, %s20, 1
          %s229 = scalar_lea.vmem %s3, %s228
        $region32: #{tpu_custom_call.1} parent=15 // pred_fallthru
          _
      $region16: #{tpu_custom_call.1} parent=5 // pred_fallthru
        _
      %p230 = scmp.le.s32.totalorder 1, %s13
      %p231 = scmp.lt.s32.totalorder %s13, 3
      %p232 = pnand %p230, %p231
      %p233 = pneg %p232
      // Predicated region
      $region33: #{tpu_custom_call.1} parent=5 // pred_check
        _
      $region34: #{tpu_custom_call.1} parent=5 // pred_check_branch
        %235 = sbr.rel (%p232) target = $region36
      $region35: #{tpu_custom_call.1} parent=5 // pred_region
        %s236 = ssub.s32 %s13, 1
        %s237 = smul.u32 2, %s24
        %p238 = scmp.lt.s32.totalorder %s23, 1
        %s239 = scalar_select %p238, %s23, 1
        %p240 = scmp.lt.s32.totalorder %s237, 1
        %s241 = scalar_select %p240, %s237, 1
        %s242 = smul.addr %s241, 2
        %s243 = smul.addr %s239, 4
        %s244 = sadd.s32 %s242, %s243
        %s245 = smul.addr %s244, 4
        %s246 = scalar_lea.vmem %s0, %s245
        %p247 = pneg %p60
        %p248 = pneg %p57
        %p249 = scmp.lt.s32.totalorder %s23, 1
        %s250 = scalar_select %p249, %s23, 1
        %p251 = scmp.lt.s32.totalorder %s25, 0
        %s252 = scalar_select %p251, %s25, 0
        %s253 = smul.addr %s250, 32
        %s254 = sadd.s32 %s252, %s253
        %s255 = smul.addr %s254, 4
        %s256 = scalar_lea.vmem %s1, %s255
        %p257 = pneg %p88
        %p258 = pneg %p85
        %p259 = scmp.lt.s32.totalorder %s23, 1
        %s260 = scalar_select %p259, %s23, 1
        %p261 = scmp.lt.s32.totalorder %s25, 0
        %s262 = scalar_select %p261, %s25, 0
        %s263 = sadd.s32 %s262, %s260
        %s264 = smul.addr %s263, 4
        %s265 = scalar_lea.vmem %s2, %s264
        %p266 = pneg %p116
        %p267 = pneg %p113
        %p268 = scmp.lt.s32.totalorder %s23, 1
        %s269 = scalar_select %p268, %s23, 1
        %s270 = scalar_lea.vmem %s3, %s269
        %p271 = pneg %p142
        %p272 = pneg %p139
        %p273 = pneg %p170
        %p274 = pneg %p167
        %s275 = sand.u32 %s157, 1
        %s276 = scalar_lea.sflag [#allocation4], %s275
        %s277 = sand.u32 %s157, 1
        %s278 = smul.addr %s277, 16
        %s279 = scalar_lea.vmem [#allocation3], %s278
        %s280 = smul.u32 2, %s24
        %p281 = scmp.lt.s32.totalorder %s23, 1
        %s282 = scalar_select %p281, %s23, 1
        %p283 = scmp.lt.s32.totalorder %s280, 1
        %s284 = scalar_select %p283, %s280, 1
        %s285 = smul.addr %s284, 2
        %s286 = smul.addr %s282, 4
        %s287 = sadd.s32 %s285, %s286
        %s288 = smul.addr %s287, 4
        %s289 = scalar_lea.vmem %s0, %s288
        %s290 = smul.u32 2, %s24
        %p291 = scmp.lt.s32.totalorder %s23, 1
        %s292 = scalar_select %p291, %s23, 1
        %p293 = scmp.lt.s32.totalorder %s25, 0
        %s294 = scalar_select %p293, %s25, 0
        %s295 = smul.addr %s292, 32
        %s296 = sadd.s32 %s294, %s295
        %s297 = smul.addr %s296, 4
        %s298 = scalar_lea.vmem %s1, %s297
        %p299 = scmp.lt.s32.totalorder %s23, 1
        %s300 = scalar_select %p299, %s23, 1
        %p301 = scmp.lt.s32.totalorder %s25, 0
        %s302 = scalar_select %p301, %s25, 0
        %s303 = sadd.s32 %s302, %s300
        %s304 = smul.addr %s303, 4
        %s305 = scalar_lea.vmem %s2, %s304
        %p306 = scmp.lt.s32.totalorder %s23, 1
        %s307 = scalar_select %p306, %s23, 1
        %s308 = scalar_lea.vmem %s3, %s307
        %s309 = smul.u32 2, %s24
        %p311 = scmp.eq.s32.totalorder %s25, 0
        // Predicated region
        $region37: #{tpu_custom_call.1} parent=35 // pred_check
          %p312 = pneg %p311
        $region38: #{tpu_custom_call.1} parent=35 // pred_check_branch
          %314 = sbr.rel (%p312) target = $region40
        $region39: #{tpu_custom_call.1} parent=35 // pred_region
          %315 = vst [vmem:[#allocation2] sm:$0xff] 0.0
          %316 = vst [vmem:[#allocation2 + $0x8] sm:$0xff] 0.0
        $region40: #{tpu_custom_call.1} parent=35 // pred_fallthru
          _
        %v317 = vld [vmem:[%s289] sm:$0xff]
        %v318 = vld [vmem:[%s289 + $0x8] sm:$0xff]
        %v319 = vld [vmem:[%s298] sm:$0xf]
        %v320 = vld [vmem:[%s298 + $0x4] sm:$0xf]
        %v321 = vld [vmem:[%s298 + $0x8] sm:$0xf]
        %v322 = vld [vmem:[%s298 + $0xc] sm:$0xf]
        %v323 = vld [vmem:[%s298 + $0x10] sm:$0xf]
        %v324 = vld [vmem:[%s298 + $0x14] sm:$0xf]
        %v325 = vld [vmem:[%s298 + $0x18] sm:$0xf]
        %v326 = vld [vmem:[%s298 + $0x1c] sm:$0xf]
        %v327 = vld [vmem:[%s298 + $0x20] sm:$0xf]
        %v328 = vld [vmem:[%s298 + $0x24] sm:$0xf]
        %v329 = vld [vmem:[%s298 + $0x28] sm:$0xf]
        %v330 = vld [vmem:[%s298 + $0x2c] sm:$0xf]
        %v331 = vld [vmem:[%s298 + $0x30] sm:$0xf]
        %v332 = vld [vmem:[%s298 + $0x34] sm:$0xf]
        %v333 = vld [vmem:[%s298 + $0x38] sm:$0xf]
        %v334 = vld [vmem:[%s298 + $0x3c] sm:$0xf]
        %v335 = vld [vmem:[%s298 + $0x40] sm:$0xf]
        %v336 = vld [vmem:[%s298 + $0x44] sm:$0xf]
        %v337 = vld [vmem:[%s298 + $0x48] sm:$0xf]
        %v338 = vld [vmem:[%s298 + $0x4c] sm:$0xf]
        %v339 = vld [vmem:[%s298 + $0x50] sm:$0xf]
        %v340 = vld [vmem:[%s298 + $0x54] sm:$0xf]
        %v341 = vld [vmem:[%s298 + $0x58] sm:$0xf]
        %v342 = vld [vmem:[%s298 + $0x5c] sm:$0xf]
        %v343 = vld [vmem:[%s298 + $0x60] sm:$0xf]
        %v344 = vld [vmem:[%s298 + $0x64] sm:$0xf]
        %v345 = vld [vmem:[%s298 + $0x68] sm:$0xf]
        %v346 = vld [vmem:[%s298 + $0x6c] sm:$0xf]
        %v347 = vld [vmem:[%s298 + $0x70] sm:$0xf]
        %v348 = vld [vmem:[%s298 + $0x74] sm:$0xf]
        %v349 = vld [vmem:[%s298 + $0x78] sm:$0xf]
        %v350 = vld [vmem:[%s298 + $0x7c] sm:$0xf]
        %v353 = vunpack.c.l.b16 %v317
        %v354 = vunpack.c.h.b16 %v317
        %v355 = vunpack.c.l.b16 %v318
        %v356 = vunpack.c.h.b16 %v318
        %v357 = vpack.c.b16 %v355, %v353
        %v358 = vpack.c.b16 %v356, %v354
        %v393 = vunpack.c.l.b16 %v319
        %v394 = vunpack.c.l.b16 %v320
        %v395 = vunpack.c.l.b16 %v321
        %v396 = vunpack.c.l.b16 %v322
        %v397 = vunpack.c.l.b16 %v323
        %v398 = vunpack.c.l.b16 %v324
        %v399 = vunpack.c.l.b16 %v325
        %v400 = vunpack.c.l.b16 %v326
        %v401 = vunpack.c.l.b16 %v327
        %v402 = vunpack.c.l.b16 %v328
        %v403 = vunpack.c.l.b16 %v329
        %v404 = vunpack.c.l.b16 %v330
        %v405 = vunpack.c.l.b16 %v331
        %v406 = vunpack.c.l.b16 %v332
        %v407 = vunpack.c.l.b16 %v333
        %v408 = vunpack.c.l.b16 %v334
        %v409 = vunpack.c.l.b16 %v335
        %v410 = vunpack.c.l.b16 %v336
        %v411 = vunpack.c.l.b16 %v337
        %v412 = vunpack.c.l.b16 %v338
        %v413 = vunpack.c.l.b16 %v339
        %v414 = vunpack.c.l.b16 %v340
        %v415 = vunpack.c.l.b16 %v341
        %v416 = vunpack.c.l.b16 %v342
        %v417 = vunpack.c.l.b16 %v343
        %v418 = vunpack.c.l.b16 %v344
        %v419 = vunpack.c.l.b16 %v345
        %v420 = vunpack.c.l.b16 %v346
        %v421 = vunpack.c.l.b16 %v347
        %v422 = vunpack.c.l.b16 %v348
        %v423 = vunpack.c.l.b16 %v349
        %v424 = vunpack.c.l.b16 %v350
        %v425 = vpack.c.b16 %v394, %v393
        %v426 = vpack.c.b16 %v396, %v395
        %v427 = vpack.c.b16 %v398, %v397
        %v428 = vpack.c.b16 %v400, %v399
        %v429 = vpack.c.b16 %v402, %v401
        %v430 = vpack.c.b16 %v404, %v403
        %v431 = vpack.c.b16 %v406, %v405
        %v432 = vpack.c.b16 %v408, %v407
        %v433 = vpack.c.b16 %v410, %v409
        %v434 = vpack.c.b16 %v412, %v411
        %v435 = vpack.c.b16 %v414, %v413
        %v436 = vpack.c.b16 %v416, %v415
        %v437 = vpack.c.b16 %v418, %v417
        %v438 = vpack.c.b16 %v420, %v419
        %v439 = vpack.c.b16 %v422, %v421
        %v440 = vpack.c.b16 %v424, %v423
        %457 = vmatpush.bf16.msra.mxu0 %v432
        %458 = vmatpush.bf16.msra.mxu0 %v431
        %459 = vmatpush.bf16.msra.mxu0 %v430
        %460 = vmatpush.bf16.msra.mxu0 %v429
        %461 = vmatpush.bf16.msra.mxu0 %v428
        %462 = vmatpush.bf16.msra.mxu0 %v427
        %463 = vmatpush.bf16.msra.mxu0 %v426
        %464 = vmatpush.bf16.msra.mxu0 %v425
        %465 = vmatmul.bf16.gmra.mxu0 %v357
        %v466 = vpop.f32.mrf.mxu0
        %v467 = vadd.f32 0.0, %v466
        %v468 = vpop.f32.mrf.mxu0
        %v469 = vadd.f32 0.0, %v468
        %470 = vdwg.mxu0
        %471 = vmatpush.bf16.msra.mxu0 %v440
        %472 = vmatpush.bf16.msra.mxu0 %v439
        %473 = vmatpush.bf16.msra.mxu0 %v438
        %474 = vmatpush.bf16.msra.mxu0 %v437
        %475 = vmatpush.bf16.msra.mxu0 %v436
        %476 = vmatpush.bf16.msra.mxu0 %v435
        %477 = vmatpush.bf16.msra.mxu0 %v434
        %478 = vmatpush.bf16.msra.mxu0 %v433
        %479 = vmatmul.bf16.gmra.mxu0 %v358
        %v480 = vpop.f32.mrf.mxu0
        %v481 = vadd.f32 %v467, %v480
        %v482 = vpop.f32.mrf.mxu0
        %v483 = vadd.f32 %v469, %v482
        %484 = vdwg.mxu0
        %v485 = vld [vmem:[#allocation2] sm:$0xff]
        %v486 = vld [vmem:[#allocation2 + $0x8] sm:$0xff]
        %v487 = vpack.c.bf16 %v483, %v481
        %v488 = vld [vmem:[%s305] sm:$0xf]
        %vm489 = vcmask 64512
        %v491 = vsel %vm489, %v487, 0
        %vm493 = vcmask 1043456
        %v495 = vsel %vm493, %v488, 0
        %497 = vmatpush.bf16.msra.mxu0 0
        %498 = vmatpush.bf16.msra.mxu0 0
        %499 = vmatpush.bf16.msra.mxu0 0
        %500 = vmatpush.bf16.msra.mxu0 0
        %501 = vmatpush.bf16.msra.mxu0 0
        %502 = vmatpush.bf16.msra.mxu0 0
        %503 = vmatpush.bf16.msra.mxu0 0
        %504 = vmatpush.bf16.msra.mxu0 %v495
        %505 = vmatmul.bf16.gmra.mxu0 %v491
        %v506 = vpop.f32.mrf.mxu0
        %v507 = vadd.f32 0.0, %v506
        %v508 = vpop.f32.mrf.mxu0
        %v509 = vadd.f32 0.0, %v508
        %510 = vdwg.mxu0
        %v511 = vadd.f32 %v485, %v507
        %v512 = vadd.f32 %v486, %v509
        %513 = vst [vmem:[#allocation2] sm:$0xff] %v511
        %514 = vst [vmem:[#allocation2 + $0x8] sm:$0xff] %v512
        // Predicated region
        $region41: #{tpu_custom_call.1} parent=35 // pred_check
          %p515 = pneg %p311
        $region42: #{tpu_custom_call.1} parent=35 // pred_check_branch
          %517 = sbr.rel (%p515) target = $region44
        $region43: #{tpu_custom_call.1} parent=35 // pred_region
          %v518 = vld [vmem:[#allocation2] sm:$0xff]
          %v519 = vld [vmem:[#allocation2 + $0x8] sm:$0xff]
          %v520 = vld [vmem:[%s308] sm:$0x1]
          %v522 = vperm.slane %v520, 0
          %v524 = vmul.f32 %v518, %v522
          %v525 = vmul.f32 %v519, %v522
          %526 = vst [vmem:[%s279] sm:$0xff] %v524
          %527 = vst [vmem:[%s279 + $0x8] sm:$0xff] %v525
        $region44: #{tpu_custom_call.1} parent=35 // pred_fallthru
          _
        %s528 = sand.u32 %s157, 1
        %s529 = scalar_lea.sflag [#allocation4], %s528
        %s530 = sand.u32 %s157, 1
        %s531 = smul.addr %s530, 16
        %s532 = scalar_lea.vmem [#allocation3], %s531
        // Predicated region
        $region45: #{tpu_custom_call.1} parent=35 // pred_check
          %p533 = pneg %p167
        $region46: #{tpu_custom_call.1} parent=35 // pred_check_branch
          %535 = sbr.rel (%p533) target = $region48
        $region47: #{tpu_custom_call.1} parent=35 // pred_region
          %s536 = smul.u32 2, %s24
          %538 = vsyncadd %s529, 0
          %s539 = smul.addr %s23, 2
          %s540 = sadd.s32 %s536, %s539
          %s541 = smul.addr %s540, 8
          %s542 = scalar_lea.hbm %s4, %s541
          %s543 = sshll.u32 %s532, 4
          %s544 = int_to_ptr.vmem [resolvable:$true] %s543
          %s545 = sshll.u32 %s542, 4
          %s546 = int_to_ptr.hbm [resolvable:$true] %s545
          %551 = dma.vmem_to_hbm [thread:$0]  %s544, 256, %s546, %s529, 128, 128, 8
        $region48: #{tpu_custom_call.1} parent=35 // pred_fallthru
          _
      $region36: #{tpu_custom_call.1} parent=5 // pred_fallthru
        _
      %p552 = scmp.le.s32.totalorder 2, %s13
      // Predicated region
      $region49: #{tpu_custom_call.1} parent=5 // pred_check
        %p553 = pneg %p552
      $region50: #{tpu_custom_call.1} parent=5 // pred_check_branch
        %555 = sbr.rel (%p553) target = $region52
      $region51: #{tpu_custom_call.1} parent=5 // pred_region
        %s556 = ssub.s32 %s13, 2
        // Predicated region
        $region53: #{tpu_custom_call.1} parent=51 // pred_check
          %p557 = pneg %p173
        $region54: #{tpu_custom_call.1} parent=51 // pred_check_branch
          %559 = sbr.rel (%p557) target = $region56
        $region55: #{tpu_custom_call.1} parent=51 // pred_region
          %s560 = sand.u32 %s158, 1
          %s561 = scalar_lea.sflag [#allocation4], %s560
          %s562 = sand.u32 %s158, 1
          %s563 = smul.addr %s562, 16
          %s564 = scalar_lea.vmem [#allocation3], %s563
          %566 = dma.done %s561, 256
        $region56: #{tpu_custom_call.1} parent=51 // pred_fallthru
          _
      $region52: #{tpu_custom_call.1} parent=5 // pred_fallthru
        _
    $region6: #{tpu_custom_call.1} parent=1 // loop_footer
      %s17 = sadd.s32 1, %s13
    $region7: #{tpu_custom_call.1} parent=1 // loop_footer_branch
      %12 = sbr.rel target = $region3
    $region8: #{tpu_custom_call.1} parent=1 // loop_exit
      _
    %567 = vsyncpa [#allocation4], 1
    %s568 = scalar_lea.sflag [#allocation4], 1
    %569 = vsyncpa %s568, 1

// kernel: tpu_custom_call.1
$region0: #{tpu_custom_call.1}
  #allocation0 [shape = 'u32[]', space=smem, size = 0x4, offset = 0x4, fixed_abs, tag = 'smem constant byte address 0x4 - core index']
  #allocation1 [shape = 'u32[72,128]{1,0:T(1,128)}', space=vmem, size = 0x9000, scoped, tag = 'internal scratch']
  #allocation2 [shape = 'f32[16,128]{1,0:T(8,128)}', space=vmem, size = 0x2000, scoped, tag = 'scratch operand']
  %s0 = inlined_call_operand.vmem [shape: bf16[2,16,256], index: 0, kind: input, shape index: {}]
  %s1 = inlined_call_operand.vmem [shape: bf16[2,256,8], index: 1, kind: input, shape index: {}]
  %s2 = inlined_call_operand.vmem [shape: bf16[2,8,128], index: 2, kind: input, shape index: {}]
  %s3 = inlined_call_operand.vmem [shape: f32[2,1,128], index: 3, kind: input, shape index: {}]
  %s4 = inlined_call_operand.hbm [shape: f32[2,16,128], index: 4, kind: output, shape index: {}]
  %s5 = sld [smem:[#allocation0]]
  $region57: #{tpu_custom_call.1} parent=0
    _
  %s7 = ssub.s32 1, %s5
  %s8 = scalar_select 0, %s7, %s5
  $region1: #{tpu_custom_call.1} parent=0
    #allocation3 [shape = 'u8[16384]{0}', space=vmem, size = 0x4000, scoped, tag = 'output window, operand 0']
    #allocation4 [shape = 's32[2]{0}', space=sflag, size = 0x8, scoped, tag = 'scoped memory for tpu_custom_call.1']
    %9 = vsyncpa [#allocation4], 0
    %s10 = scalar_lea.sflag [#allocation4], 1
    %11 = vsyncpa %s10, 0
    loop: start=0, step=1, limit=4
    $region2: #{tpu_custom_call.1} parent=1 // loop_pre_header
      _
    $region3: #{tpu_custom_call.1} parent=1 // loop_header
      %s13 = sphi 0, %s17
      %p14 = scmp.ge.s32.totalorder %s13, 4
      %s20 = sphi 0, %s39
      %s21 = sphi 0, %s35
      %s22 = sphi 0, %s31
      %s23 = sphi 0, %s20
      %s24 = sphi 0, %s21
      %s25 = sphi 0, %s22
      %s26 = sphi 0, %s23
      %s27 = sphi 0, %s24
      %s28 = sphi 0, %s25
      %s44 = sphi 0, %s46
      %s47 = sphi 0, %s44
      %s48 = sphi 0, %s47
      %s64 = sphi 0, %s48
      %s72 = sphi 0, %s74
      %s75 = sphi 0, %s72
      %s76 = sphi 0, %s75
      %s92 = sphi 0, %s76
      %s100 = sphi 0, %s102
      %s103 = sphi 0, %s100
      %s104 = sphi 0, %s103
      %s120 = sphi 0, %s104
      %s126 = sphi 0, %s128
      %s129 = sphi 0, %s126
      %s130 = sphi 0, %s129
      %s146 = sphi 0, %s130
      %s154 = sphi 0, %s156
      %s157 = sphi 0, %s154
      %s158 = sphi 0, %s157
      %s174 = sphi 0, %s158
    $region4: #{tpu_custom_call.1} parent=1 // loop_header_branch
      %16 = sbr.rel (%p14) target = $region8
    $region5: #{tpu_custom_call.1} parent=1 // loop_body
      %s18 = ssub.s32 %s13, 1
      %s19 = ssub.s32 %s13, 2
      %s29 = sadd.s32 1, %s22
      %p30 = scmp.ge.s32.totalorder %s29, 1
      %s31 = scalar_select %p30, 0, %s29
      %s32 = sadd.s32 1, %s21
      %s33 = scalar_select %p30, %s32, %s21
      %p34 = scmp.ge.s32.totalorder %s33, 1
      %s35 = scalar_select %p34, 0, %s33
      %s36 = sadd.s32 1, %s20
      %s37 = scalar_select %p34, %s36, %s20
      %p38 = scmp.ge.s32.totalorder %s37, 2
      %s39 = scalar_select %p38, 0, %s37
      %s40 = ssub.s32 %s20, %s39
      %s41 = ssub.s32 %s21, %s35
      %s42 = sor.u32 %s40, %s41
      %p43 = scmp.eq.s32.totalorder %s42, 0
      %s45 = sadd.s32 %s44, 1
      %s46 = scalar_select %p43, %s44, %s45
      %p49 = pneg %p43
      %p50 = scmp.eq.s32.totalorder %s13, 1
      %p51 = por %p49, %p50
      %p52 = scmp.ne.s32.totalorder %s44, %s47
      %p53 = scmp.eq.s32.totalorder %s13, 0
      %p54 = por %p52, %p53
      %p55 = scmp.ne.s32.totalorder %s44, %s47
      %p56 = scmp.eq.s32.totalorder %s18, 1
      %p57 = por %p55, %p56
      %p58 = scmp.ne.s32.totalorder %s47, %s48
      %p59 = scmp.eq.s32.totalorder %s18, 0
      %p60 = por %p58, %p59
      %p61 = scmp.ne.s32.totalorder %s47, %s48
      %p62 = scmp.eq.s32.totalorder %s19, 1
      %p63 = por %p61, %p62
      %p65 = scmp.ne.s32.totalorder %s48, %s64
      %p66 = scmp.eq.s32.totalorder %s19, 0
      %p67 = por %p65, %p66
      %s68 = ssub.s32 %s20, %s39
      %s69 = ssub.s32 %s22, %s31
      %s70 = sor.u32 %s68, %s69
      %p71 = scmp.eq.s32.totalorder %s70, 0
      %s73 = sadd.s32 %s72, 1
      %s74 = scalar_select %p71, %s72, %s73
      %p77 = pneg %p71
      %p78 = scmp.eq.s32.totalorder %s13, 1
      %p79 = por %p77, %p78
      %p80 = scmp.ne.s32.totalorder %s72, %s75
      %p81 = scmp.eq.s32.totalorder %s13, 0
      %p82 = por %p80, %p81
      %p83 = scmp.ne.s32.totalorder %s72, %s75
      %p84 = scmp.eq.s32.totalorder %s18, 1
      %p85 = por %p83, %p84
      %p86 = scmp.ne.s32.totalorder %s75, %s76
      %p87 = scmp.eq.s32.totalorder %s18, 0
      %p88 = por %p86, %p87
      %p89 = scmp.ne.s32.totalorder %s75, %s76
      %p90 = scmp.eq.s32.totalorder %s19, 1
      %p91 = por %p89, %p90
      %p93 = scmp.ne.s32.totalorder %s76, %s92
      %p94 = scmp.eq.s32.totalorder %s19, 0
      %p95 = por %p93, %p94
      %s96 = ssub.s32 %s20, %s39
      %s97 = ssub.s32 %s22, %s31
      %s98 = sor.u32 %s96, %s97
      %p99 = scmp.eq.s32.totalorder %s98, 0
      %s101 = sadd.s32 %s100, 1
      %s102 = scalar_select %p99, %s100, %s101
      %p105 = pneg %p99
      %p106 = scmp.eq.s32.totalorder %s13, 1
      %p107 = por %p105, %p106
      %p108 = scmp.ne.s32.totalorder %s100, %s103
      %p109 = scmp.eq.s32.totalorder %s13, 0
      %p110 = por %p108, %p109
      %p111 = scmp.ne.s32.totalorder %s100, %s103
      %p112 = scmp.eq.s32.totalorder %s18, 1
      %p113 = por %p111, %p112
      %p114 = scmp.ne.s32.totalorder %s103, %s104
      %p115 = scmp.eq.s32.totalorder %s18, 0
      %p116 = por %p114, %p115
      %p117 = scmp.ne.s32.totalorder %s103, %s104
      %p118 = scmp.eq.s32.totalorder %s19, 1
      %p119 = por %p117, %p118
      %p121 = scmp.ne.s32.totalorder %s104, %s120
      %p122 = scmp.eq.s32.totalorder %s19, 0
      %p123 = por %p121, %p122
      %s124 = ssub.s32 %s20, %s39
      %p125 = scmp.eq.s32.totalorder %s124, 0
      %s127 = sadd.s32 %s126, 1
      %s128 = scalar_select %p125, %s126, %s127
      %p131 = pneg %p125
      %p132 = scmp.eq.s32.totalorder %s13, 1
      %p133 = por %p131, %p132
      %p134 = scmp.ne.s32.totalorder %s126, %s129
      %p135 = scmp.eq.s32.totalorder %s13, 0
      %p136 = por %p134, %p135
      %p137 = scmp.ne.s32.totalorder %s126, %s129
      %p138 = scmp.eq.s32.totalorder %s18, 1
      %p139 = por %p137, %p138
      %p140 = scmp.ne.s32.totalorder %s129, %s130
      %p141 = scmp.eq.s32.totalorder %s18, 0
      %p142 = por %p140, %p141
      %p143 = scmp.ne.s32.totalorder %s129, %s130
      %p144 = scmp.eq.s32.totalorder %s19, 1
      %p145 = por %p143, %p144
      %p147 = scmp.ne.s32.totalorder %s130, %s146
      %p148 = scmp.eq.s32.totalorder %s19, 0
      %p149 = por %p147, %p148
      %s150 = ssub.s32 %s20, %s39
      %s151 = ssub.s32 %s21, %s35
      %s152 = sor.u32 %s150, %s151
      %p153 = scmp.eq.s32.totalorder %s152, 0
      %s155 = sadd.s32 %s154, 1
      %s156 = scalar_select %p153, %s154, %s155
      %p159 = pneg %p153
      %p160 = scmp.eq.s32.totalorder %s13, 1
      %p161 = por %p159, %p160
      %p162 = scmp.ne.s32.totalorder %s154, %s157
      %p163 = scmp.eq.s32.totalorder %s13, 0
      %p164 = por %p162, %p163
      %p165 = scmp.ne.s32.totalorder %s154, %s157
      %p166 = scmp.eq.s32.totalorder %s18, 1
      %p167 = por %p165, %p166
      %p168 = scmp.ne.s32.totalorder %s157, %s158
      %p169 = scmp.eq.s32.totalorder %s18, 0
      %p170 = por %p168, %p169
      %p171 = scmp.ne.s32.totalorder %s157, %s158
      %p172 = scmp.eq.s32.totalorder %s19, 1
      %p173 = por %p171, %p172
      %p175 = scmp.ne.s32.totalorder %s158, %s174
      %p176 = scmp.eq.s32.totalorder %s19, 0
      %p177 = por %p175, %p176
      %p178 = scmp.le.s32.totalorder 1, %s13
      %p179 = scmp.lt.s32.totalorder %s13, 3
      %p180 = pnand %p178, %p179
      %p181 = pneg %p180
      // Predicated region
      $region9: #{tpu_custom_call.1} parent=5 // pred_check
        _
      $region10: #{tpu_custom_call.1} parent=5 // pred_check_branch
        %183 = sbr.rel (%p180) target = $region12
      $region11: #{tpu_custom_call.1} parent=5 // pred_region
        %s184 = ssub.s32 %s13, 1
      $region12: #{tpu_custom_call.1} parent=5 // pred_fallthru
        _
      %p185 = scmp.lt.s32.totalorder %s13, 2
      // Predicated region
      $region13: #{tpu_custom_call.1} parent=5 // pred_check
        %p186 = pneg %p185
      $region14: #{tpu_custom_call.1} parent=5 // pred_check_branch
        %188 = sbr.rel (%p186) target = $region16
      $region15: #{tpu_custom_call.1} parent=5 // pred_region
        // Predicated region
        $region17: #{tpu_custom_call.1} parent=15 // pred_check
          %p189 = pneg %p54
        $region18: #{tpu_custom_call.1} parent=15 // pred_check_branch
          %191 = sbr.rel (%p189) target = $region20
        $region19: #{tpu_custom_call.1} parent=15 // pred_region
          %s192 = smul.u32 2, %s21
          %p193 = scmp.lt.s32.totalorder %s20, 1
          %s194 = scalar_select %p193, %s20, 1
          %p195 = scmp.lt.s32.totalorder %s192, 1
          %s196 = scalar_select %p195, %s192, 1
          %s197 = smul.addr %s196, 2
          %s198 = smul.addr %s194, 4
          %s199 = sadd.s32 %s197, %s198
          %s200 = smul.addr %s199, 4
          %s201 = scalar_lea.vmem %s0, %s200
          %s202 = smul.u32 2, %s21
        $region20: #{tpu_custom_call.1} parent=15 // pred_fallthru
          _
        // Predicated region
        $region21: #{tpu_custom_call.1} parent=15 // pred_check
          %p203 = pneg %p82
        $region22: #{tpu_custom_call.1} parent=15 // pred_check_branch
          %205 = sbr.rel (%p203) target = $region24
        $region23: #{tpu_custom_call.1} parent=15 // pred_region
          %p206 = scmp.lt.s32.totalorder %s20, 1
          %s207 = scalar_select %p206, %s20, 1
          %p208 = scmp.lt.s32.totalorder %s22, 0
          %s209 = scalar_select %p208, %s22, 0
          %s210 = smul.addr %s207, 32
          %s211 = sadd.s32 %s209, %s210
          %s212 = smul.addr %s211, 4
          %s213 = scalar_lea.vmem %s1, %s212
        $region24: #{tpu_custom_call.1} parent=15 // pred_fallthru
          _
        // Predicated region
        $region25: #{tpu_custom_call.1} parent=15 // pred_check
          %p214 = pneg %p110
        $region26: #{tpu_custom_call.1} parent=15 // pred_check_branch
          %216 = sbr.rel (%p214) target = $region28
        $region27: #{tpu_custom_call.1} parent=15 // pred_region
          %p217 = scmp.lt.s32.totalorder %s20, 1
          %s218 = scalar_select %p217, %s20, 1
          %p219 = scmp.lt.s32.totalorder %s22, 0
          %s220 = scalar_select %p219, %s22, 0
          %s221 = sadd.s32 %s220, %s218
          %s222 = smul.addr %s221, 4
          %s223 = scalar_lea.vmem %s2, %s222
        $region28: #{tpu_custom_call.1} parent=15 // pred_fallthru
          _
        // Predicated region
        $region29: #{tpu_custom_call.1} parent=15 // pred_check
          %p224 = pneg %p136
        $region30: #{tpu_custom_call.1} parent=15 // pred_check_branch
          %226 = sbr.rel (%p224) target = $region32
        $region31: #{tpu_custom_call.1} parent=15 // pred_region
          %p227 = scmp.lt.s32.totalorder %s20, 1
          %s228 = scalar_select %p227, %s20, 1
          %s229 = scalar_lea.vmem %s3, %s228
        $region32: #{tpu_custom_call.1} parent=15 // pred_fallthru
          _
      $region16: #{tpu_custom_call.1} parent=5 // pred_fallthru
        _
      %p230 = scmp.le.s32.totalorder 1, %s13
      %p231 = scmp.lt.s32.totalorder %s13, 3
      %p232 = pnand %p230, %p231
      %p233 = pneg %p232
      // Predicated region
      $region33: #{tpu_custom_call.1} parent=5 // pred_check
        _
      $region34: #{tpu_custom_call.1} parent=5 // pred_check_branch
        %235 = sbr.rel (%p232) target = $region36
      $region35: #{tpu_custom_call.1} parent=5 // pred_region
        %s236 = ssub.s32 %s13, 1
        %s237 = smul.u32 2, %s24
        %p238 = scmp.lt.s32.totalorder %s23, 1
        %s239 = scalar_select %p238, %s23, 1
        %p240 = scmp.lt.s32.totalorder %s237, 1
        %s241 = scalar_select %p240, %s237, 1
        %s242 = smul.addr %s241, 2
        %s243 = smul.addr %s239, 4
        %s244 = sadd.s32 %s242, %s243
        %s245 = smul.addr %s244, 4
        %s246 = scalar_lea.vmem %s0, %s245
        %p247 = pneg %p60
        %p248 = pneg %p57
        %p249 = scmp.lt.s32.totalorder %s23, 1
        %s250 = scalar_select %p249, %s23, 1
        %p251 = scmp.lt.s32.totalorder %s25, 0
        %s252 = scalar_select %p251, %s25, 0
        %s253 = smul.addr %s250, 32
        %s254 = sadd.s32 %s252, %s253
        %s255 = smul.addr %s254, 4
        %s256 = scalar_lea.vmem %s1, %s255
        %p257 = pneg %p88
        %p258 = pneg %p85
        %p259 = scmp.lt.s32.totalorder %s23, 1
        %s260 = scalar_select %p259, %s23, 1
        %p261 = scmp.lt.s32.totalorder %s25, 0
        %s262 = scalar_select %p261, %s25, 0
        %s263 = sadd.s32 %s262, %s260
        %s264 = smul.addr %s263, 4
        %s265 = scalar_lea.vmem %s2, %s264
        %p266 = pneg %p116
        %p267 = pneg %p113
        %p268 = scmp.lt.s32.totalorder %s23, 1
        %s269 = scalar_select %p268, %s23, 1
        %s270 = scalar_lea.vmem %s3, %s269
        %p271 = pneg %p142
        %p272 = pneg %p139
        %p273 = pneg %p170
        %p274 = pneg %p167
        %s275 = sand.u32 %s157, 1
        %s276 = scalar_lea.sflag [#allocation4], %s275
        %s277 = sand.u32 %s157, 1
        %s278 = smul.addr %s277, 16
        %s279 = scalar_lea.vmem [#allocation3], %s278
        %s280 = smul.u32 2, %s24
        %p281 = scmp.lt.s32.totalorder %s23, 1
        %s282 = scalar_select %p281, %s23, 1
        %p283 = scmp.lt.s32.totalorder %s280, 1
        %s284 = scalar_select %p283, %s280, 1
        %s285 = smul.addr %s284, 2
        %s286 = smul.addr %s282, 4
        %s287 = sadd.s32 %s285, %s286
        %s288 = smul.addr %s287, 4
        %s289 = scalar_lea.vmem %s0, %s288
        %s290 = smul.u32 2, %s24
        %p291 = scmp.lt.s32.totalorder %s23, 1
        %s292 = scalar_select %p291, %s23, 1
        %p293 = scmp.lt.s32.totalorder %s25, 0
        %s294 = scalar_select %p293, %s25, 0
        %s295 = smul.addr %s292, 32
        %s296 = sadd.s32 %s294, %s295
        %s297 = smul.addr %s296, 4
        %s298 = scalar_lea.vmem %s1, %s297
        %p299 = scmp.lt.s32.totalorder %s23, 1
        %s300 = scalar_select %p299, %s23, 1
        %p301 = scmp.lt.s32.totalorder %s25, 0
        %s302 = scalar_select %p301, %s25, 0
        %s303 = sadd.s32 %s302, %s300
        %s304 = smul.addr %s303, 4
        %s305 = scalar_lea.vmem %s2, %s304
        %p306 = scmp.lt.s32.totalorder %s23, 1
        %s307 = scalar_select %p306, %s23, 1
        %s308 = scalar_lea.vmem %s3, %s307
        %s309 = smul.u32 2, %s24
        %p311 = scmp.eq.s32.totalorder %s25, 0
        // Predicated region
        $region37: #{tpu_custom_call.1} parent=35 // pred_check
          %p312 = pneg %p311
        $region38: #{tpu_custom_call.1} parent=35 // pred_check_branch
          %314 = sbr.rel (%p312) target = $region40
        $region39: #{tpu_custom_call.1} parent=35 // pred_region
          %315 = vst [vmem:[#allocation2] sm:$0xff] 0.0
          %316 = vst [vmem:[#allocation2 + $0x8] sm:$0xff] 0.0
        $region40: #{tpu_custom_call.1} parent=35 // pred_fallthru
          _
        %v317 = vld [vmem:[%s289] sm:$0xff]
        %v318 = vld [vmem:[%s289 + $0x8] sm:$0xff]
        %v319 = vld [vmem:[%s298] sm:$0xf]
        %v320 = vld [vmem:[%s298 + $0x4] sm:$0xf]
        %v321 = vld [vmem:[%s298 + $0x8] sm:$0xf]
        %v322 = vld [vmem:[%s298 + $0xc] sm:$0xf]
        %v323 = vld [vmem:[%s298 + $0x10] sm:$0xf]
        %v324 = vld [vmem:[%s298 + $0x14] sm:$0xf]
        %v325 = vld [vmem:[%s298 + $0x18] sm:$0xf]
        %v326 = vld [vmem:[%s298 + $0x1c] sm:$0xf]
        %v327 = vld [vmem:[%s298 + $0x20] sm:$0xf]
        %v328 = vld [vmem:[%s298 + $0x24] sm:$0xf]
        %v329 = vld [vmem:[%s298 + $0x28] sm:$0xf]
        %v330 = vld [vmem:[%s298 + $0x2c] sm:$0xf]
        %v331 = vld [vmem:[%s298 + $0x30] sm:$0xf]
        %v332 = vld [vmem:[%s298 + $0x34] sm:$0xf]
        %v333 = vld [vmem:[%s298 + $0x38] sm:$0xf]
        %v334 = vld [vmem:[%s298 + $0x3c] sm:$0xf]
        %v335 = vld [vmem:[%s298 + $0x40] sm:$0xf]
        %v336 = vld [vmem:[%s298 + $0x44] sm:$0xf]
        %v337 = vld [vmem:[%s298 + $0x48] sm:$0xf]
        %v338 = vld [vmem:[%s298 + $0x4c] sm:$0xf]
        %v339 = vld [vmem:[%s298 + $0x50] sm:$0xf]
        %v340 = vld [vmem:[%s298 + $0x54] sm:$0xf]
        %v341 = vld [vmem:[%s298 + $0x58] sm:$0xf]
        %v342 = vld [vmem:[%s298 + $0x5c] sm:$0xf]
        %v343 = vld [vmem:[%s298 + $0x60] sm:$0xf]
        %v344 = vld [vmem:[%s298 + $0x64] sm:$0xf]
        %v345 = vld [vmem:[%s298 + $0x68] sm:$0xf]
        %v346 = vld [vmem:[%s298 + $0x6c] sm:$0xf]
        %v347 = vld [vmem:[%s298 + $0x70] sm:$0xf]
        %v348 = vld [vmem:[%s298 + $0x74] sm:$0xf]
        %v349 = vld [vmem:[%s298 + $0x78] sm:$0xf]
        %v350 = vld [vmem:[%s298 + $0x7c] sm:$0xf]
        %v353 = vunpack.c.l.b16 %v317
        %v354 = vunpack.c.h.b16 %v317
        %v355 = vunpack.c.l.b16 %v318
        %v356 = vunpack.c.h.b16 %v318
        %v357 = vpack.c.b16 %v355, %v353
        %v358 = vpack.c.b16 %v356, %v354
        %v393 = vunpack.c.l.b16 %v319
        %v394 = vunpack.c.l.b16 %v320
        %v395 = vunpack.c.l.b16 %v321
        %v396 = vunpack.c.l.b16 %v322
        %v397 = vunpack.c.l.b16 %v323
        %v398 = vunpack.c.l.b16 %v324
        %v399 = vunpack.c.l.b16 %v325
        %v400 = vunpack.c.l.b16 %v326
        %v401 = vunpack.c.l.b16 %v327
        %v402 = vunpack.c.l.b16 %v328
        %v403 = vunpack.c.l.b16 %v329
        %v404 = vunpack.c.l.b16 %v330
        %v405 = vunpack.c.l.b16 %v331
        %v406 = vunpack.c.l.b16 %v332
        %v407 = vunpack.c.l.b16 %v333
        %v408 = vunpack.c.l.b16 %v334
        %v409 = vunpack.c.l.b16 %v335
        %v410 = vunpack.c.l.b16 %v336
        %v411 = vunpack.c.l.b16 %v337
        %v412 = vunpack.c.l.b16 %v338
        %v413 = vunpack.c.l.b16 %v339
        %v414 = vunpack.c.l.b16 %v340
        %v415 = vunpack.c.l.b16 %v341
        %v416 = vunpack.c.l.b16 %v342
        %v417 = vunpack.c.l.b16 %v343
        %v418 = vunpack.c.l.b16 %v344
        %v419 = vunpack.c.l.b16 %v345
        %v420 = vunpack.c.l.b16 %v346
        %v421 = vunpack.c.l.b16 %v347
        %v422 = vunpack.c.l.b16 %v348
        %v423 = vunpack.c.l.b16 %v349
        %v424 = vunpack.c.l.b16 %v350
        %v425 = vpack.c.b16 %v394, %v393
        %v426 = vpack.c.b16 %v396, %v395
        %v427 = vpack.c.b16 %v398, %v397
        %v428 = vpack.c.b16 %v400, %v399
        %v429 = vpack.c.b16 %v402, %v401
        %v430 = vpack.c.b16 %v404, %v403
        %v431 = vpack.c.b16 %v406, %v405
        %v432 = vpack.c.b16 %v408, %v407
        %v433 = vpack.c.b16 %v410, %v409
        %v434 = vpack.c.b16 %v412, %v411
        %v435 = vpack.c.b16 %v414, %v413
        %v436 = vpack.c.b16 %v416, %v415
        %v437 = vpack.c.b16 %v418, %v417
        %v438 = vpack.c.b16 %v420, %v419
        %v439 = vpack.c.b16 %v422, %v421
        %v440 = vpack.c.b16 %v424, %v423
        %457 = vmatpush.bf16.msra.mxu0 %v432
        %458 = vmatpush.bf16.msra.mxu0 %v431
        %459 = vmatpush.bf16.msra.mxu0 %v430
        %460 = vmatpush.bf16.msra.mxu0 %v429
        %461 = vmatpush.bf16.msra.mxu0 %v428
        %462 = vmatpush.bf16.msra.mxu0 %v427
        %463 = vmatpush.bf16.msra.mxu0 %v426
        %464 = vmatpush.bf16.msra.mxu0 %v425
        %465 = vmatmul.bf16.gmra.mxu0 %v357
        %v466 = vpop.f32.mrf.mxu0
        %v467 = vadd.f32 0.0, %v466
        %v468 = vpop.f32.mrf.mxu0
        %v469 = vadd.f32 0.0, %v468
        %470 = vdwg.mxu0
        %471 = vmatpush.bf16.msra.mxu0 %v440
        %472 = vmatpush.bf16.msra.mxu0 %v439
        %473 = vmatpush.bf16.msra.mxu0 %v438
        %474 = vmatpush.bf16.msra.mxu0 %v437
        %475 = vmatpush.bf16.msra.mxu0 %v436
        %476 = vmatpush.bf16.msra.mxu0 %v435
        %477 = vmatpush.bf16.msra.mxu0 %v434
        %478 = vmatpush.bf16.msra.mxu0 %v433
        %479 = vmatmul.bf16.gmra.mxu0 %v358
        %v480 = vpop.f32.mrf.mxu0
        %v481 = vadd.f32 %v467, %v480
        %v482 = vpop.f32.mrf.mxu0
        %v483 = vadd.f32 %v469, %v482
        %484 = vdwg.mxu0
        %v485 = vld [vmem:[#allocation2] sm:$0xff]
        %v486 = vld [vmem:[#allocation2 + $0x8] sm:$0xff]
        %v487 = vpack.c.bf16 %v483, %v481
        %v488 = vld [vmem:[%s305] sm:$0xf]
        %vm489 = vcmask 64512
        %v491 = vsel %vm489, %v487, 0
        %vm493 = vcmask 1043456
        %v495 = vsel %vm493, %v488, 0
        %497 = vmatpush.bf16.msra.mxu0 0
        %498 = vmatpush.bf16.msra.mxu0 0
        %499 = vmatpush.bf16.msra.mxu0 0
        %500 = vmatpush.bf16.msra.mxu0 0
        %501 = vmatpush.bf16.msra.mxu0 0
        %502 = vmatpush.bf16.msra.mxu0 0
        %503 = vmatpush.bf16.msra.mxu0 0
        %504 = vmatpush.bf16.msra.mxu0 %v495
        %505 = vmatmul.bf16.gmra.mxu0 %v491
        %v506 = vpop.f32.mrf.mxu0
        %v507 = vadd.f32 0.0, %v506
        %v508 = vpop.f32.mrf.mxu0
        %v509 = vadd.f32 0.0, %v508
        %510 = vdwg.mxu0
        %v511 = vadd.f32 %v485, %v507
        %v512 = vadd.f32 %v486, %v509
        %513 = vst [vmem:[#allocation2] sm:$0xff] %v511
        %514 = vst [vmem:[#allocation2 + $0x8] sm:$0xff] %v512
        // Predicated region
        $region41: #{tpu_custom_call.1} parent=35 // pred_check
          %p515 = pneg %p311
        $region42: #{tpu_custom_call.1} parent=35 // pred_check_branch
          %517 = sbr.rel (%p515) target = $region44
        $region43: #{tpu_custom_call.1} parent=35 // pred_region
          %v518 = vld [vmem:[#allocation2] sm:$0xff]
          %v519 = vld [vmem:[#allocation2 + $0x8] sm:$0xff]
          %v520 = vld [vmem:[%s308] sm:$0x1]
          %v522 = vperm.slane %v520, 0
          %v524 = vmul.f32 %v518, %v522
          %v525 = vmul.f32 %v519, %v522
          %526 = vst [vmem:[%s279] sm:$0xff] %v524
          %527 = vst [vmem:[%s279 + $0x8] sm:$0xff] %v525
        $region44: #{tpu_custom_call.1} parent=35 // pred_fallthru
          _
        %s528 = sand.u32 %s157, 1
        %s529 = scalar_lea.sflag [#allocation4], %s528
        %s530 = sand.u32 %s157, 1
        %s531 = smul.addr %s530, 16
        %s532 = scalar_lea.vmem [#allocation3], %s531
        // Predicated region
        $region45: #{tpu_custom_call.1} parent=35 // pred_check
          %p533 = pneg %p167
        $region46: #{tpu_custom_call.1} parent=35 // pred_check_branch
          %535 = sbr.rel (%p533) target = $region48
        $region47: #{tpu_custom_call.1} parent=35 // pred_region
          %s536 = smul.u32 2, %s24
          %538 = vsyncadd %s529, 0
          %s539 = smul.addr %s23, 2
          %s540 = sadd.s32 %s536, %s539
          %s541 = smul.addr %s540, 8
          %s542 = scalar_lea.hbm %s4, %s541
          %s543 = sshll.u32 %s532, 4
          %s544 = int_to_ptr.vmem [resolvable:$true] %s543
          %s545 = sshll.u32 %s542, 4
          %s546 = int_to_ptr.hbm [resolvable:$true] %s545
          %551 = dma.vmem_to_hbm [thread:$0]  %s544, 256, %s546, %s529, 128, 128, 8
        $region48: #{tpu_custom_call.1} parent=35 // pred_fallthru
          _
      $region36: #{tpu_custom_call.1} parent=5 // pred_fallthru
        _
      %p552 = scmp.le.s32.totalorder 2, %s13
      // Predicated region
      $region49: #{tpu_custom_call.1} parent=5 // pred_check
        %p553 = pneg %p552
      $region50: #{tpu_custom_call.1} parent=5 // pred_check_branch
        %555 = sbr.rel (%p553) target = $region52
      $region51: #{tpu_custom_call.1} parent=5 // pred_region
        %s556 = ssub.s32 %s13, 2
        // Predicated region
        $region53: #{tpu_custom_call.1} parent=51 // pred_check
          %p557 = pneg %p173
        $region54: #{tpu_custom_call.1} parent=51 // pred_check_branch
          %559 = sbr.rel (%p557) target = $region56
        $region55: #{tpu_custom_call.1} parent=51 // pred_region
          %s560 = sand.u32 %s158, 1
          %s561 = scalar_lea.sflag [#allocation4], %s560
          %s562 = sand.u32 %s158, 1
          %s563 = smul.addr %s562, 16
          %s564 = scalar_lea.vmem [#allocation3], %s563
          %566 = dma.done %s561, 256
        $region56: #{tpu_custom_call.1} parent=51 // pred_fallthru
          _
      $region52: #{tpu_custom_call.1} parent=5 // pred_fallthru
        _
    $region6: #{tpu_custom_call.1} parent=1 // loop_footer
      %s17 = sadd.s32 1, %s13
    $region7: #{tpu_custom_call.1} parent=1 // loop_footer_branch
      %12 = sbr.rel target = $region3
    $region8: #{tpu_custom_call.1} parent=1 // loop_exit
      _
    %567 = vsyncpa [#allocation4], 1
    %s568 = scalar_lea.sflag [#allocation4], 1
    %569 = vsyncpa %s568, 1

</llo_original>
